<compile_context>
chip_gen: v5e
topology: v5e:2x2
jax: 0.10.0
libtpu: 0.0.40
codegen_flags: <defaults>
</compile_context>

<pallas_src>
import jax
import jax.numpy as jnp
from jax.experimental import pallas as pl
from jax.experimental.pallas import tpu as pltpu


def _addcmul_kernel(value_ref, x_ref, y_ref, z_ref, o_ref):
    # value_ref lives in SMEM (scalar path); x/y/z/o are VMEM tiles.
    v = value_ref[0]
    x = x_ref[...].astype(jnp.float32)
    y = y_ref[...].astype(jnp.float32)
    z = z_ref[...].astype(jnp.float32)
    o_ref[...] = (x + v * (y * z)).astype(o_ref.dtype)


def _pick_lanes(n_elems):
    """Widest lane axis (multiple of 128) that divides n and keeps >=8 sublanes."""
    for cand in (2048, 1024, 512, 256, 128):
        if n_elems % cand == 0 and n_elems // cand >= 8:
            return cand
    for cand in (2048, 1024, 512, 256, 128):
        if n_elems % cand == 0:
            return cand
    return 128  # non-divisible: wrapper pads the tail


def addcmul(x, y, z, value):
    """x + value * y * z, elementwise (all inputs same shape)."""
    assert x.shape == y.shape == z.shape, "broadcasting not needed for this module"
    orig_shape = x.shape
    dtype = x.dtype
    n = x.size
    itemsize = jnp.dtype(dtype).itemsize

    lanes = _pick_lanes(n)

    # Row-tile sized for ~1 MiB per buffer: 4 streams x 2 pipeline buffers
    # = ~8 MiB scoped VMEM, safe on v5e (16 MiB default), v6e and v7x.
    target_tile_bytes = 1 << 20
    block_rows = max(8, (target_tile_bytes // (lanes * itemsize)) // 8 * 8)

    rows_needed = pl.cdiv(n, lanes)
    # Don't blow up tiny inputs: cap the tile at the (8-aligned) row count.
    block_rows = min(block_rows, ((rows_needed + 7) // 8) * 8)

    grid_rows = pl.cdiv(rows_needed, block_rows)
    rows = grid_rows * block_rows
    padded_n = rows * lanes

    def to_slab(a):
        a = a.reshape(-1)
        if padded_n != n:
            a = jnp.pad(a, (0, padded_n - n))
        return a.reshape(rows, lanes)

    x2, y2, z2 = to_slab(x), to_slab(y), to_slab(z)
    value_arr = jnp.asarray(value, dtype=jnp.float32).reshape(1)

    tile = pl.BlockSpec((block_rows, lanes), lambda i: (i, 0))

    out2 = pl.pallas_call(
        _addcmul_kernel,
        out_shape=jax.ShapeDtypeStruct((rows, lanes), dtype),
        grid=(grid_rows,),
        in_specs=[
            pl.BlockSpec(memory_space=pltpu.MemorySpace.SMEM),  # value scalar
            tile, tile, tile,
        ],
        out_specs=tile,
        compiler_params=pltpu.CompilerParams(
            dimension_semantics=("parallel",),
        ),
    )(value_arr, x2, y2, z2)

    return out2.reshape(-1)[:n].reshape(orig_shape)


if __name__ == "__main__":
    key = jax.random.PRNGKey(0)
    kx, ky, kz = jax.random.split(key, 3)

    shape = (2, 4, 16, 16)  # B, C, H, W (NCHW, matching the PyTorch module inputs)
    x = jax.random.normal(kx, shape, dtype=jnp.float32)
    y = jax.random.normal(ky, shape, dtype=jnp.float32)
    z = jax.random.normal(kz, shape, dtype=jnp.float32)
    value = 0.5  # the module's __init__(value)

    out = addcmul(x, y, z, value)
    out = jax.block_until_ready(out)

    ref = x + value * y * z
    assert jnp.allclose(out, ref, atol=1e-6, rtol=1e-6), "mismatch vs reference"

    print("KERNEL_OK")
</pallas_src>

<mosaic_0001>
module attributes {stable_mosaic.version = 11 : i64} {
  func.func @_addcmul_kernel(%arg0: i32, %arg1: memref<1xf32, #tpu.memory_space<smem>>, %arg2: memref<8x256xf32, #tpu.memory_space<vmem>>, %arg3: memref<8x256xf32, #tpu.memory_space<vmem>>, %arg4: memref<8x256xf32, #tpu.memory_space<vmem>>, %arg5: memref<8x256xf32, #tpu.memory_space<vmem>>) attributes {dimension_semantics = [#tpu.dimension_semantics<parallel>], iteration_bounds = array<i64: 1>, scalar_prefetch = 0 : i64, scratch_operands = 0 : i64, tpu.core_type = #tpu.core_type<tc>, window_params = [{transform_indices = @transform_0, window_bounds = array<i64: 1>}, {transform_indices = @transform_1, window_bounds = array<i64: 8, 256>}, {transform_indices = @transform_2, window_bounds = array<i64: 8, 256>}, {transform_indices = @transform_3, window_bounds = array<i64: 8, 256>}, {transform_indices = @transform_4, window_bounds = array<i64: 8, 256>}]} {
    %c0 = arith.constant 0 : index
    %0 = memref.load %arg1[%c0] : memref<1xf32, #tpu.memory_space<smem>>
    %c0_0 = arith.constant 0 : index
    %c0_1 = arith.constant 0 : index
    %1 = vector.load %arg2[%c0_0, %c0_1] : memref<8x256xf32, #tpu.memory_space<vmem>>, vector<8x256xf32>
    %c0_2 = arith.constant 0 : index
    %c0_3 = arith.constant 0 : index
    %2 = vector.load %arg3[%c0_2, %c0_3] : memref<8x256xf32, #tpu.memory_space<vmem>>, vector<8x256xf32>
    %c0_4 = arith.constant 0 : index
    %c0_5 = arith.constant 0 : index
    %3 = vector.load %arg4[%c0_4, %c0_5] : memref<8x256xf32, #tpu.memory_space<vmem>>, vector<8x256xf32>
    %4 = arith.mulf %2, %3 : vector<8x256xf32>
    %5 = vector.broadcast %0 : f32 to vector<8x256xf32>
    %6 = arith.mulf %5, %4 : vector<8x256xf32>
    %7 = arith.addf %1, %6 : vector<8x256xf32>
    %c0_6 = arith.constant 0 : index
    %c0_7 = arith.constant 0 : index
    %8 = vector.load %arg5[%c0_6, %c0_7] : memref<8x256xf32, #tpu.memory_space<vmem>>, vector<8x256xf32>
    tpu.vector_store %arg5[%c0_6, %c0_7], %7 {strides = array<i32>} : memref<8x256xf32, #tpu.memory_space<vmem>>, vector<8x256xf32>,
    return
  }
  func.func @transform_0(%arg0: i32) -> i32 {
    %c0_i32 = arith.constant 0 : i32
    %c0_i32_0 = arith.constant 0 : i32
    return %c0_i32 : i32
  }
  func.func @transform_1(%arg0: i32) -> (i32, i32) {
    %c0_i32 = arith.constant 0 : i32
    %c0_i32_0 = arith.constant 0 : i32
    return %arg0, %c0_i32 : i32, i32
  }
  func.func @transform_2(%arg0: i32) -> (i32, i32) {
    %c0_i32 = arith.constant 0 : i32
    %c0_i32_0 = arith.constant 0 : i32
    return %arg0, %c0_i32 : i32, i32
  }
  func.func @transform_3(%arg0: i32) -> (i32, i32) {
    %c0_i32 = arith.constant 0 : i32
    %c0_i32_0 = arith.constant 0 : i32
    return %arg0, %c0_i32 : i32, i32
  }
  func.func @transform_4(%arg0: i32) -> (i32, i32) {
    %c0_i32 = arith.constant 0 : i32
    %c0_i32_0 = arith.constant 0 : i32
    return %arg0, %c0_i32 : i32, i32
  }
}

</mosaic_0001>

<llo_original>
// kernel: tpu_custom_call.1
$region0: #{tpu_custom_call.1}
  #allocation0 [shape = 'u32[]', space=smem, size = 0x4, offset = 0x4, fixed_abs, tag = 'smem constant byte address 0x4 - core index']
  #allocation1 [shape = 'u32[72,128]{1,0:T(1,128)}', space=vmem, size = 0x9000, scoped, tag = 'internal scratch']
  #allocation2 [shape = 'f32[1]{0:T(128)S(6)}', space=smem, size = 0x200, scoped, tag = 'scoped memory for tpu_custom_call.1']
  %s0 = inlined_call_operand.<no memory space> [shape: f32[1], index: 0, kind: input, shape index: {}]
  %s1 = inlined_call_operand.hbm [shape: f32[8,256], index: 1, kind: input, shape index: {}]
  %s2 = inlined_call_operand.hbm [shape: f32[8,256], index: 2, kind: input, shape index: {}]
  %s3 = inlined_call_operand.hbm [shape: f32[8,256], index: 3, kind: input, shape index: {}]
  %s4 = inlined_call_operand.hbm [shape: f32[8,256], index: 4, kind: output, shape index: {}]
  %s5 = sld [smem:[#allocation0]]
  $region38: #{tpu_custom_call.1} parent=0
    _
  %s7 = ssub.s32 1, %s5
  %s8 = scalar_select 0, %s7, %s5
  %9 = sst [smem:[#allocation2]] %s0
  $region1: #{tpu_custom_call.1} parent=0
    #allocation3 [shape = 'u8[8192]{0}', space=vmem, size = 0x2000, scoped, tag = 'input window, operand 1, single buffered']
    #allocation4 [shape = 's32[1]{0}', space=sflag, size = 0x4, scoped, tag = 'scoped memory for tpu_custom_call.1']
    #allocation5 [shape = 's32[1]{0}', space=sflag, size = 0x4, scoped, tag = 'scoped memory for tpu_custom_call.1']
    #allocation6 [shape = 'u8[8192]{0}', space=vmem, size = 0x2000, scoped, tag = 'input window, operand 2, single buffered']
    #allocation7 [shape = 's32[1]{0}', space=sflag, size = 0x4, scoped, tag = 'scoped memory for tpu_custom_call.1']
    #allocation8 [shape = 'u8[8192]{0}', space=vmem, size = 0x2000, scoped, tag = 'input window, operand 3, single buffered']
    #allocation9 [shape = 'u8[8192]{0}', space=vmem, size = 0x2000, scoped, tag = 'output window, operand 0, single buffered']
    %10 = vsyncpa [#allocation4], 0
    %11 = vsyncpa [#allocation7], 0
    %12 = vsyncpa [#allocation5], 0
    // Predicated region
    $region2: #{tpu_custom_call.1} parent=1 // pred_check
      _
    $region3: #{tpu_custom_call.1} parent=1 // pred_check_branch
      %14 = sbr.rel (0) target = $region5
    $region4: #{tpu_custom_call.1} parent=1 // pred_region
      _
    $region5: #{tpu_custom_call.1} parent=1 // pred_fallthru
      _
    // Predicated region
    $region6: #{tpu_custom_call.1} parent=1 // pred_check
      _
    $region7: #{tpu_custom_call.1} parent=1 // pred_check_branch
      %16 = sbr.rel (0) target = $region9
    $region8: #{tpu_custom_call.1} parent=1 // pred_region
      %18 = vsyncadd [#allocation4], 0
      %s20 = sshll.u32 %s1, 4
      %s21 = int_to_ptr.hbm [resolvable:$true] %s20
      %s22 = sshll.u32 [#allocation3], 4
      %s23 = int_to_ptr.vmem [resolvable:$true] %s22
      %25 = dma.hbm_to_vmem [thread:$0]  %s21, 256, %s23, [#allocation4]
    $region9: #{tpu_custom_call.1} parent=1 // pred_fallthru
      _
    // Predicated region
    $region10: #{tpu_custom_call.1} parent=1 // pred_check
      _
    $region11: #{tpu_custom_call.1} parent=1 // pred_check_branch
      %27 = sbr.rel (0) target = $region13
    $region12: #{tpu_custom_call.1} parent=1 // pred_region
      %29 = vsyncadd [#allocation7], 0
      %s31 = sshll.u32 %s2, 4
      %s32 = int_to_ptr.hbm [resolvable:$true] %s31
      %s33 = sshll.u32 [#allocation6], 4
      %s34 = int_to_ptr.vmem [resolvable:$true] %s33
      %36 = dma.hbm_to_vmem [thread:$0]  %s32, 256, %s34, [#allocation7]
    $region13: #{tpu_custom_call.1} parent=1 // pred_fallthru
      _
    // Predicated region
    $region14: #{tpu_custom_call.1} parent=1 // pred_check
      _
    $region15: #{tpu_custom_call.1} parent=1 // pred_check_branch
      %38 = sbr.rel (0) target = $region17
    $region16: #{tpu_custom_call.1} parent=1 // pred_region
      %40 = vsyncadd [#allocation7], 0
      %s42 = sshll.u32 %s3, 4
      %s43 = int_to_ptr.hbm [resolvable:$true] %s42
      %s44 = sshll.u32 [#allocation8], 4
      %s45 = int_to_ptr.vmem [resolvable:$true] %s44
      %47 = dma.hbm_to_vmem [thread:$0]  %s43, 256, %s45, [#allocation7]
    $region17: #{tpu_custom_call.1} parent=1 // pred_fallthru
      _
    // Predicated region
    $region18: #{tpu_custom_call.1} parent=1 // pred_check
      _
    $region19: #{tpu_custom_call.1} parent=1 // pred_check_branch
      %49 = sbr.rel (0) target = $region21
    $region20: #{tpu_custom_call.1} parent=1 // pred_region
      %51 = dma.done [#allocation4], 256
    $region21: #{tpu_custom_call.1} parent=1 // pred_fallthru
      _
    // Predicated region
    $region22: #{tpu_custom_call.1} parent=1 // pred_check
      _
    $region23: #{tpu_custom_call.1} parent=1 // pred_check_branch
      %53 = sbr.rel (0) target = $region25
    $region24: #{tpu_custom_call.1} parent=1 // pred_region
      %55 = dma.done [#allocation7], 256
    $region25: #{tpu_custom_call.1} parent=1 // pred_fallthru
      _
    // Predicated region
    $region26: #{tpu_custom_call.1} parent=1 // pred_check
      _
    $region27: #{tpu_custom_call.1} parent=1 // pred_check_branch
      %57 = sbr.rel (0) target = $region29
    $region28: #{tpu_custom_call.1} parent=1 // pred_region
      %59 = dma.done [#allocation7], 256
    $region29: #{tpu_custom_call.1} parent=1 // pred_fallthru
      _
    %s60 = sld [smem:[#allocation2]]
    %v61 = vld [vmem:[#allocation3] sm:$0xff]
    %v62 = vld [vmem:[#allocation3 + $0x8] sm:$0xff]
    %v63 = vld [vmem:[#allocation6] sm:$0xff]
    %v64 = vld [vmem:[#allocation6 + $0x8] sm:$0xff]
    %v65 = vld [vmem:[#allocation8] sm:$0xff]
    %v66 = vld [vmem:[#allocation8 + $0x8] sm:$0xff]
    %v67 = vmul.f32 %v63, %v65
    %v68 = vmul.f32 %v64, %v66
    %v69 = vstv %s60
    %v70 = vmul.f32 %v69, %v67
    %v71 = vmul.f32 %v69, %v68
    %v72 = vadd.f32 %v61, %v70
    %v73 = vadd.f32 %v62, %v71
    %74 = vst [vmem:[#allocation9] sm:$0xff] %v72
    %75 = vst [vmem:[#allocation9 + $0x8] sm:$0xff] %v73
    // Predicated region
    $region30: #{tpu_custom_call.1} parent=1 // pred_check
      _
    $region31: #{tpu_custom_call.1} parent=1 // pred_check_branch
      %77 = sbr.rel (0) target = $region33
    $region32: #{tpu_custom_call.1} parent=1 // pred_region
      %79 = vsyncadd [#allocation5], 0
      %s81 = sshll.u32 [#allocation9], 4
      %s82 = int_to_ptr.vmem [resolvable:$true] %s81
      %s83 = sshll.u32 %s4, 4
      %s84 = int_to_ptr.hbm [resolvable:$true] %s83
      %86 = dma.vmem_to_hbm [thread:$0]  %s82, 256, %s84, [#allocation5]
    $region33: #{tpu_custom_call.1} parent=1 // pred_fallthru
      _
    // Predicated region
    $region34: #{tpu_custom_call.1} parent=1 // pred_check
      _
    $region35: #{tpu_custom_call.1} parent=1 // pred_check_branch
      %88 = sbr.rel (0) target = $region37
    $region36: #{tpu_custom_call.1} parent=1 // pred_region
      %90 = dma.done [#allocation5], 256
    $region37: #{tpu_custom_call.1} parent=1 // pred_fallthru
      _
    %91 = vsyncpa [#allocation4], 1
    %92 = vsyncpa [#allocation7], 1
    %93 = vsyncpa [#allocation5], 1

</llo_original>
